<compile_context>
chip_gen: v6e
topology: v6e:2x2x1
jax: 0.10.0
libtpu: 0.0.40
codegen_flags: <defaults>
</compile_context>

<pallas_src>
import math

import jax
import jax.numpy as jnp
from jax.experimental import pallas as pl
from jax.experimental.pallas import tpu as pltpu


_TARGET_BLOCK_BYTES = 1 << 20  # ~1 MiB (f32) per block buffer


def _choose_slab(total):
    """Pick (lanes, rows, padded_total). Prefer wide lane-dense slabs with zero padding."""
    for lanes in (1024, 512, 256, 128):
        if total % lanes == 0:
            return lanes, total // lanes, total
    lanes = 128                                   # ragged fallback: minimal padding
    rows = pl.cdiv(total, lanes)
    return lanes, rows, rows * lanes


def _tile_rows_for(rows, lanes):
    t = max(8, ((_TARGET_BLOCK_BYTES // (lanes * 4)) // 8) * 8)
    if rows <= t:
        return rows                               # full-extent block (legal even if not a multiple of 8)
    return t


def _lif_math(h, thresh, leak, soft_reset):
    """h is f32. Returns (spike_f32, u_f32) with torch-matching forward values."""
    spike = (h - thresh > 0.0).astype(jnp.float32)
    if soft_reset:
        u = (h - spike * thresh) * leak
    else:
        u = h * leak * (1.0 - spike)
    return spike, u


def _make_step_kernel(thresh, leak, soft_reset, has_mem):
    if has_mem:
        def kernel(s_ref, mem_ref, spike_ref, u_ref):
            h = s_ref[...].astype(jnp.float32) + mem_ref[...].astype(jnp.float32)
            spike, u = _lif_math(h, thresh, leak, soft_reset)
            spike_ref[...] = spike.astype(spike_ref.dtype)
            u_ref[...] = u.astype(u_ref.dtype)
    else:
        def kernel(s_ref, spike_ref, u_ref):
            h = s_ref[...].astype(jnp.float32)    # membrane_potential == 0 (reset_mem case)
            spike, u = _lif_math(h, thresh, leak, soft_reset)
            spike_ref[...] = spike.astype(spike_ref.dtype)
            u_ref[...] = u.astype(u_ref.dtype)
    return kernel


def lif_spike_forward(s, membrane_potential=None, *, thresh=0.5, leak=0.5,
                      soft_reset=True, share=False, beta=None, bias=None):
    """Single LIF timestep. Returns (spike, new_membrane_potential), both shaped/typed like `s`.

    `share`, `beta`, `bias` are accepted for signature parity; unused when quant_u=False.
    """
    del share, beta, bias
    orig_shape = s.shape
    out_dtype = s.dtype
    total = math.prod(orig_shape)

    # The module initializes membrane_potential = 0; treat a concrete 0 like None (drops one input).
    if isinstance(membrane_potential, (int, float)) and membrane_potential == 0:
        membrane_potential = None

    lanes, rows, padded = _choose_slab(total)
    needs_pad = padded != total

    def to_slab(x):
        flat = x.reshape(-1)
        if needs_pad:
            flat = jnp.pad(flat, (0, padded - total))
        return flat.reshape(rows, lanes)

    args = [to_slab(s)]
    has_mem = membrane_potential is not None
    if has_mem:
        mem = jnp.broadcast_to(jnp.asarray(membrane_potential, dtype=out_dtype), orig_shape)
        args.append(to_slab(mem))

    tile_rows = _tile_rows_for(rows, lanes)
    grid = (pl.cdiv(rows, tile_rows),)
    spec = pl.BlockSpec((tile_rows, lanes), lambda i: (i, 0))

    kernel = _make_step_kernel(float(thresh), float(leak), bool(soft_reset), has_mem)

    spike2, u2 = pl.pallas_call(
        kernel,
        out_shape=(
            jax.ShapeDtypeStruct((rows, lanes), out_dtype),
            jax.ShapeDtypeStruct((rows, lanes), out_dtype),
        ),
        grid_spec=pltpu.PrefetchScalarGridSpec(
            num_scalar_prefetch=0,
            grid=grid,
            in_specs=[spec] * len(args),
            out_specs=[spec, spec],
        ),
        compiler_params=pltpu.CompilerParams(
            dimension_semantics=("parallel",)),
    )(*args)

    if needs_pad:
        spike = spike2.reshape(-1)[:total].reshape(orig_shape)
        u_new = u2.reshape(-1)[:total].reshape(orig_shape)
    else:
        spike = spike2.reshape(orig_shape)
        u_new = u2.reshape(orig_shape)
    return spike, u_new


def _make_seq_kernel(thresh, leak, soft_reset):
    def kernel(s_ref, spike_ref, u_ref, mem_scratch):
        t = pl.program_id(1)

        @pl.when(t == 0)
        def _():
            mem_scratch[...] = jnp.zeros_like(mem_scratch)

        h = s_ref[...].astype(jnp.float32) + mem_scratch[...]
        spike, u = _lif_math(h, thresh, leak, soft_reset)
        mem_scratch[...] = u                       # membrane stays resident in VMEM across T
        spike_ref[...] = spike.astype(spike_ref.dtype)

        @pl.when(t == pl.num_programs(1) - 1)
        def _():
            u_ref[...] = u.astype(u_ref.dtype)     # final membrane only -> 1 HBM write total
    return kernel


def lif_spike_forward_sequence(s_seq, *, thresh=0.5, leak=0.5, soft_reset=True):
    """Fused T-step LIF (membrane starts at 0, i.e. after reset_mem()).

    s_seq: shape (T, ...). Returns (spikes of shape (T, ...), final membrane of shape (...)).
    """
    T = s_seq.shape[0]
    step_shape = s_seq.shape[1:]
    out_dtype = s_seq.dtype
    total = math.prod(step_shape)

    lanes, rows, padded = _choose_slab(total)
    needs_pad = padded != total

    flat = s_seq.reshape(T, -1)
    if needs_pad:
        flat = jnp.pad(flat, ((0, 0), (0, padded - total)))
    s3 = flat.reshape(T, rows, lanes)

    tile_rows = _tile_rows_for(rows, lanes)
    grid = (pl.cdiv(rows, tile_rows), T)           # rows: parallel; time: arbitrary (carries state)

    ts_spec = pl.BlockSpec((None, tile_rows, lanes), lambda i, t: (t, i, 0))
    u_spec = pl.BlockSpec((tile_rows, lanes), lambda i, t: (i, 0))

    kernel = _make_seq_kernel(float(thresh), float(leak), bool(soft_reset))

    spikes3, u2 = pl.pallas_call(
        kernel,
        out_shape=(
            jax.ShapeDtypeStruct((T, rows, lanes), out_dtype),
            jax.ShapeDtypeStruct((rows, lanes), out_dtype),
        ),
        grid_spec=pltpu.PrefetchScalarGridSpec(
            num_scalar_prefetch=0,
            grid=grid,
            in_specs=[ts_spec],
            out_specs=[ts_spec, u_spec],
            scratch_shapes=[pltpu.VMEM((tile_rows, lanes), jnp.float32)],
        ),
        compiler_params=pltpu.CompilerParams(
            dimension_semantics=("parallel", "arbitrary")),
    )(s3)

    if needs_pad:
        spikes = spikes3.reshape(T, -1)[:, :total].reshape((T,) + step_shape)
        u_final = u2.reshape(-1)[:total].reshape(step_shape)
    else:
        spikes = spikes3.reshape((T,) + step_shape)
        u_final = u2.reshape(step_shape)
    return spikes, u_final


def _reference_lif(s, mem, thresh=0.5, leak=0.5, soft_reset=True):
    h = s + mem
    spike = (h - thresh > 0).astype(jnp.float32)
    if soft_reset:
        u = (h - spike * thresh) * leak
    else:
        u = h * leak * (1.0 - spike)
    return spike, u


if __name__ == "__main__":
    key = jax.random.PRNGKey(0)
    k1, k2, k3 = jax.random.split(key, 3)

    shape = (2, 4, 16, 16)                         # NCHW conv feature map
    x1 = jax.random.normal(k1, shape, dtype=jnp.float32)
    x2 = jax.random.normal(k2, shape, dtype=jnp.float32)

    # --- Single-step kernel: t=0 (fresh membrane == 0, like the module init) then t=1 (stateful) ---
    spike1, mem1 = lif_spike_forward(x1, 0, share=False, beta=None, bias=None)
    spike2, mem2 = lif_spike_forward(x2, mem1)
    jax.block_until_ready((spike1, mem1, spike2, mem2))

    ref_s1, ref_m1 = _reference_lif(x1, jnp.zeros(shape, jnp.float32))
    ref_s2, ref_m2 = _reference_lif(x2, ref_m1)
    assert jnp.array_equal(spike1, ref_s1), "spike mismatch (t=1)"
    assert jnp.allclose(mem1, ref_m1, atol=1e-6), "membrane mismatch (t=1)"
    assert jnp.array_equal(spike2, ref_s2), "spike mismatch (t=2)"
    assert jnp.allclose(mem2, ref_m2, atol=1e-6), "membrane mismatch (t=2)"

    # --- Hard-reset variant ---
    sh, mh = lif_spike_forward(x2, mem1, soft_reset=False)
    jax.block_until_ready((sh, mh))
    ref_sh, ref_mh = _reference_lif(x2, ref_m1, soft_reset=False)
    assert jnp.array_equal(sh, ref_sh), "hard-reset spike mismatch"
    assert jnp.allclose(mh, ref_mh, atol=1e-6), "hard-reset membrane mismatch"

    # --- bf16 path (HBM arrays stay bf16; math in f32 inside the kernel) ---
    xb = x1.astype(jnp.bfloat16)
    sb, mb = lif_spike_forward(xb)
    jax.block_until_ready((sb, mb))
    assert sb.dtype == jnp.bfloat16 and mb.dtype == jnp.bfloat16
    ref_sb, ref_mb = _reference_lif(xb.astype(jnp.float32), jnp.zeros(shape, jnp.float32))
    assert jnp.array_equal(sb.astype(jnp.float32), ref_sb), "bf16 spike mismatch"
    assert jnp.allclose(mb.astype(jnp.float32), ref_mb, atol=1e-2), "bf16 membrane mismatch"

    # --- Fused T-step kernel (membrane resident in VMEM across the time axis) ---
    T = 8
    xs = jax.random.normal(k3, (T,) + shape, dtype=jnp.float32)
    spikes_seq, mem_seq = lif_spike_forward_sequence(xs)
    jax.block_until_ready((spikes_seq, mem_seq))

    mem_ref = jnp.zeros(shape, jnp.float32)
    for t in range(T):
        s_ref_t, mem_ref = _reference_lif(xs[t], mem_ref)
        assert jnp.array_equal(spikes_seq[t], s_ref_t), f"fused spike mismatch (t={t})"
    assert jnp.allclose(mem_seq, mem_ref, atol=1e-6), "fused final membrane mismatch"

    print("KERNEL_OK")
</pallas_src>

<mosaic_0001>
module attributes {stable_mosaic.version = 11 : i64} {
  func.func @kernel(%arg0: i32, %arg1: memref<2x1024xf32, #tpu.memory_space<vmem>>, %arg2: memref<2x1024xf32, #tpu.memory_space<vmem>>, %arg3: memref<2x1024xf32, #tpu.memory_space<vmem>>) attributes {dimension_semantics = [#tpu.dimension_semantics<parallel>], iteration_bounds = array<i64: 1>, scalar_prefetch = 0 : i64, scratch_operands = 0 : i64, tpu.core_type = #tpu.core_type<tc>, window_params = [{transform_indices = @transform_0, window_bounds = array<i64: 2, 1024>}, {transform_indices = @transform_1, window_bounds = array<i64: 2, 1024>}, {transform_indices = @transform_2, window_bounds = array<i64: 2, 1024>}]} {
    %c0 = arith.constant 0 : index
    %c0_0 = arith.constant 0 : index
    %0 = vector.load %arg1[%c0, %c0_0] : memref<2x1024xf32, #tpu.memory_space<vmem>>, vector<2x1024xf32>
    %cst = arith.constant 5.000000e-01 : f32
    %1 = vector.broadcast %cst : f32 to vector<2x1024xf32>
    %2 = arith.subf %0, %1 : vector<2x1024xf32>
    %cst_1 = arith.constant 0.000000e+00 : f32
    %3 = vector.broadcast %cst_1 : f32 to vector<2x1024xf32>
    %4 = arith.cmpf ogt, %2, %3 : vector<2x1024xf32>
    %5 = arith.extui %4 : vector<2x1024xi1> to vector<2x1024xi32>
    %6 = arith.sitofp %5 : vector<2x1024xi32> to vector<2x1024xf32>
    %cst_2 = arith.constant 5.000000e-01 : f32
    %7 = vector.broadcast %cst_2 : f32 to vector<2x1024xf32>
    %8 = arith.mulf %6, %7 : vector<2x1024xf32>
    %9 = arith.subf %0, %8 : vector<2x1024xf32>
    %cst_3 = arith.constant 5.000000e-01 : f32
    %10 = vector.broadcast %cst_3 : f32 to vector<2x1024xf32>
    %11 = arith.mulf %9, %10 : vector<2x1024xf32>
    %c0_4 = arith.constant 0 : index
    %c0_5 = arith.constant 0 : index
    %12 = vector.load %arg2[%c0_4, %c0_5] : memref<2x1024xf32, #tpu.memory_space<vmem>>, vector<2x1024xf32>
    tpu.vector_store %arg2[%c0_4, %c0_5], %6 {strides = array<i32>} : memref<2x1024xf32, #tpu.memory_space<vmem>>, vector<2x1024xf32>,
    %c0_6 = arith.constant 0 : index
    %c0_7 = arith.constant 0 : index
    %13 = vector.load %arg3[%c0_6, %c0_7] : memref<2x1024xf32, #tpu.memory_space<vmem>>, vector<2x1024xf32>
    tpu.vector_store %arg3[%c0_6, %c0_7], %11 {strides = array<i32>} : memref<2x1024xf32, #tpu.memory_space<vmem>>, vector<2x1024xf32>,
    return
  }
  func.func @transform_0(%arg0: i32) -> (i32, i32) {
    %c0_i32 = arith.constant 0 : i32
    %c0_i32_0 = arith.constant 0 : i32
    return %arg0, %c0_i32 : i32, i32
  }
  func.func @transform_1(%arg0: i32) -> (i32, i32) {
    %c0_i32 = arith.constant 0 : i32
    %c0_i32_0 = arith.constant 0 : i32
    return %arg0, %c0_i32 : i32, i32
  }
  func.func @transform_2(%arg0: i32) -> (i32, i32) {
    %c0_i32 = arith.constant 0 : i32
    %c0_i32_0 = arith.constant 0 : i32
    return %arg0, %c0_i32 : i32, i32
  }
}

</mosaic_0001>

<llo_original>
// kernel: tpu_custom_call.1
$region0: #{tpu_custom_call.1}
  #allocation0 [shape = 'u32[]', space=smem, size = 0x4, offset = 0x4, fixed_abs, tag = 'smem constant byte address 0x4 - core index']
  #allocation1 [shape = 'u32[144,128]{1,0:T(1,128)}', space=vmem, size = 0x12000, scoped, tag = 'internal scratch']
  %s0 = inlined_call_operand.hbm [shape: f32[2,1024], index: 0, kind: input, shape index: {}]
  %s1 = inlined_call_operand.hbm [shape: f32[2,1024], index: 1, kind: output, shape index: {0}]
  %s2 = inlined_call_operand.hbm [shape: f32[2,1024], index: 2, kind: output, shape index: {1}]
  %3 = xla_tuple %s1, %s2
  %s4 = sld [smem:[#allocation0]]
  $region26: #{tpu_custom_call.1} parent=0
    _
  %s6 = ssub.s32 1, %s4
  %s7 = scalar_select 0, %s6, %s4
  $region1: #{tpu_custom_call.1} parent=0
    #allocation2 [shape = 'u8[8192]{0}', space=vmem, size = 0x2000, scoped, tag = 'input window, operand 0, single buffered']
    #allocation3 [shape = 's32[1]{0}', space=sflag, size = 0x4, scoped, tag = 'scoped memory for tpu_custom_call.1']
    #allocation4 [shape = 's32[1]{0}', space=sflag, size = 0x4, scoped, tag = 'scoped memory for tpu_custom_call.1']
    #allocation5 [shape = 'u8[8192]{0}', space=vmem, size = 0x2000, scoped, tag = 'output window, operand 0, single buffered']
    #allocation6 [shape = 'u8[8192]{0}', space=vmem, size = 0x2000, scoped, tag = 'output window, operand 1, single buffered']
    #allocation7 [shape = 's32[1]{0}', space=sflag, size = 0x4, scoped, tag = 'scoped memory for tpu_custom_call.1']
    %8 = vsyncpa [#allocation3], 0
    %9 = vsyncpa [#allocation4], 0
    %10 = vsyncpa [#allocation7], 0
    // Predicated region
    $region2: #{tpu_custom_call.1} parent=1 // pred_check
      _
    $region3: #{tpu_custom_call.1} parent=1 // pred_check_branch
      %12 = sbr.rel (0) target = $region5
    $region4: #{tpu_custom_call.1} parent=1 // pred_region
      %s14 = ssub.s32 256, 256
      %15 = vsyncadd [#allocation3], %s14
      %s17 = sshll.u32 [#allocation2], 4
      %s18 = int_to_ptr.vmem [resolvable:$true] %s17
      %20 = dma.hbm_to_vmem [thread:$0]  %s0, 256, %s18, [#allocation3]
    $region5: #{tpu_custom_call.1} parent=1 // pred_fallthru
      _
    // Predicated region
    $region6: #{tpu_custom_call.1} parent=1 // pred_check
      _
    $region7: #{tpu_custom_call.1} parent=1 // pred_check_branch
      %22 = sbr.rel (0) target = $region9
    $region8: #{tpu_custom_call.1} parent=1 // pred_region
      %23 = dma.done [#allocation3], 256
    $region9: #{tpu_custom_call.1} parent=1 // pred_fallthru
      _
    %v24 = vld [vmem:[#allocation2] sm:$0xff]
    %v25 = vld [vmem:[#allocation2 + $0x8] sm:$0xff]
    %v26 = vsub.f32 %v24, 0.5
    %v27 = vsub.f32 %v25, 0.5
    %vm28 = vcmp.gt.f32.partialorder %v26, 0.0
    %vm29 = vcmp.gt.f32.partialorder %v27, 0.0
    %v30 = vsel %vm28, 1, 0
    %v31 = vsel %vm29, 1, 0
    %v32 = vcvt.s32.f32 %v30
    %v33 = vcvt.s32.f32 %v31
    %v34 = vmul.f32 %v32, 0.5
    %v35 = vmul.f32 %v33, 0.5
    %v36 = vsub.f32 %v24, %v34
    %v37 = vsub.f32 %v25, %v35
    %v38 = vmul.f32 %v36, 0.5
    %v39 = vmul.f32 %v37, 0.5
    %40 = vst [vmem:[#allocation5] sm:$0xff] %v32
    %41 = vst [vmem:[#allocation5 + $0x8] sm:$0xff] %v33
    %42 = vst [vmem:[#allocation6] sm:$0xff] %v38
    %43 = vst [vmem:[#allocation6 + $0x8] sm:$0xff] %v39
    // Predicated region
    $region10: #{tpu_custom_call.1} parent=1 // pred_check
      _
    $region11: #{tpu_custom_call.1} parent=1 // pred_check_branch
      %45 = sbr.rel (0) target = $region13
    $region12: #{tpu_custom_call.1} parent=1 // pred_region
      %s47 = ssub.s32 256, 256
      %48 = vsyncadd [#allocation4], %s47
      %s50 = sshll.u32 [#allocation5], 4
      %s51 = int_to_ptr.vmem [resolvable:$true] %s50
      %53 = dma.vmem_to_hbm [thread:$0]  %s51, 256, %s1, [#allocation4]
    $region13: #{tpu_custom_call.1} parent=1 // pred_fallthru
      _
    // Predicated region
    $region14: #{tpu_custom_call.1} parent=1 // pred_check
      _
    $region15: #{tpu_custom_call.1} parent=1 // pred_check_branch
      %55 = sbr.rel (0) target = $region17
    $region16: #{tpu_custom_call.1} parent=1 // pred_region
      %s57 = ssub.s32 256, 256
      %58 = vsyncadd [#allocation7], %s57
      %s60 = sshll.u32 [#allocation6], 4
      %s61 = int_to_ptr.vmem [resolvable:$true] %s60
      %63 = dma.vmem_to_hbm [thread:$0]  %s61, 256, %s2, [#allocation7]
    $region17: #{tpu_custom_call.1} parent=1 // pred_fallthru
      _
    // Predicated region
    $region18: #{tpu_custom_call.1} parent=1 // pred_check
      _
    $region19: #{tpu_custom_call.1} parent=1 // pred_check_branch
      %65 = sbr.rel (0) target = $region21
    $region20: #{tpu_custom_call.1} parent=1 // pred_region
      %66 = dma.done [#allocation4], 256
    $region21: #{tpu_custom_call.1} parent=1 // pred_fallthru
      _
    // Predicated region
    $region22: #{tpu_custom_call.1} parent=1 // pred_check
      _
    $region23: #{tpu_custom_call.1} parent=1 // pred_check_branch
      %68 = sbr.rel (0) target = $region25
    $region24: #{tpu_custom_call.1} parent=1 // pred_region
      %69 = dma.done [#allocation7], 256
    $region25: #{tpu_custom_call.1} parent=1 // pred_fallthru
      _
    %70 = vsyncpa [#allocation3], 1
    %71 = vsyncpa [#allocation4], 1
    %72 = vsyncpa [#allocation7], 1

</llo_original>
